<compile_context>
chip_gen: v5e
topology: v5e:2x2
jax: 0.10.0
libtpu: 0.0.40
codegen_flags: <defaults>
</compile_context>

<pallas_src>
import functools

import numpy as np
import jax
import jax.numpy as jnp
from jax import lax
from jax.experimental import pallas as pl
from jax.experimental.pallas import tpu as pltpu


def _round_up(a, b):
    return (a + b - 1) // b * b


def _make_stft_bases(filter_length, hop_length):
    """Deterministic buffers exactly as in STFT.__init__ (numpy FFT + pinv)."""
    scale = filter_length / hop_length
    fourier_basis = np.fft.fft(np.eye(filter_length))
    cutoff = filter_length // 2 + 1
    fourier_basis = np.vstack(
        [np.real(fourier_basis[:cutoff, :]), np.imag(fourier_basis[:cutoff, :])]
    )  # (2C, FL)
    forward_basis = fourier_basis.astype(np.float32)                            # (2C, FL)
    inverse_basis = np.linalg.pinv(scale * fourier_basis).T.astype(np.float32)  # (2C, FL)
    return forward_basis, inverse_basis, cutoff


def _stft_kernel(rows_ref, halo_ref, basis_ref, out_ref, *, hop, r, tile_t, num_frames):
    # rows_ref : (1, tile_t, hop)   audio rows owned by this time tile
    # halo_ref : (1, halo_blk, hop) the following rows (right halo, >= 2*(r-1) rows)
    # basis_ref: (FL, FL)           M = forward_basis^T @ inverse_basis
    # out_ref  : (1, tile_t, hop)   overlap-added output rows owned by this tile
    t = pl.program_id(1)
    fl = r * hop
    tf = tile_t + r - 1            # frames touching this tile's output rows

    rows = jnp.concatenate([rows_ref[0], halo_ref[0]], axis=0)   # (tile_t+halo, hop)

    # contrib[f] = frame_g @ M with g = t*tile_t - (r-1) + f; frame_g is the lane
    # concatenation of rows g..g+r-1, so the fused FLxFL matmul decomposes into r
    # MXU matmuls with contraction K = hop (no im2col materialization needed).
    contrib = jnp.dot(rows[0:tf, :], basis_ref[0:hop, :],
                      preferred_element_type=jnp.float32)        # (tf, FL)
    for j in range(1, r):
        contrib = contrib + jnp.dot(rows[j:j + tf, :],
                                    basis_ref[j * hop:(j + 1) * hop, :],
                                    preferred_element_type=jnp.float32)

    # Zero contributions of frames that do not exist globally (tile / signal edges).
    f_idx = lax.broadcasted_iota(jnp.int32, (tf, 1), 0)
    g = t * tile_t - (r - 1) + f_idx
    contrib = jnp.where(jnp.logical_and(g >= 0, g < num_frames), contrib, 0.0)

    # Overlap-add with stride hop, written straight into the output block:
    #   out_row[o] = sum_j contrib[o + (r-1) - j, j*hop:(j+1)*hop]
    acc = contrib[r - 1:r - 1 + tile_t, 0:hop]
    for j in range(1, r):
        acc = acc + contrib[r - 1 - j:r - 1 - j + tile_t, j * hop:(j + 1) * hop]
    out_ref[0] = acc


def stft_forward(x, filter_length=16, hop_length=8, tile_t=256):
    """Pallas implementation of STFT.forward: (B, N) float32 -> (B, 1, N)."""
    B, N = x.shape
    FL, hop = filter_length, hop_length
    assert FL % hop == 0, "overlap-add path assumes hop | filter_length"
    r = FL // hop

    # Fused basis: recombination is an exact identity, so forward + inverse collapse
    # into a single (FL, FL) matrix computed once on the host.
    fwd, inv, _ = _make_stft_bases(FL, hop)
    basis = jnp.asarray(
        (fwd.astype(np.float64).T @ inv.astype(np.float64)).astype(np.float32))
    # TODO(synk): optional bf16 cast of rows/basis (f32 accumulation) for extra MXU
    # throughput on v6e; kept f32 to match the PyTorch module numerics.

    T = (N + FL) // hop + 1        # conv1d output length (stride=hop, padding=FL)
    R = T + r - 1                  # audio rows touched by real frames

    # Time tiling: each grid step owns `tile_t` output rows and needs a right halo of
    # 2*(r-1) extra audio rows (rounded up to a sublane multiple for the BlockSpec).
    halo_blk = max(8, _round_up(2 * (r - 1), 8))
    tile_t = max(halo_blk, _round_up(tile_t, halo_blk))
    tile_t = min(tile_t, _round_up(T, halo_blk))
    num_tiles = -(-T // tile_t)
    T_pad = num_tiles * tile_t

    # Hop-sized audio rows (lane-dense, no im2col gather): rows_p[k] = rows[k-(r-1)],
    # zero outside; total rows = T_pad + halo_blk so every block read is in-bounds.
    x_pad = jnp.pad(x.astype(jnp.float32), ((0, 0), (FL, FL)))
    rows = x_pad[:, :R * hop].reshape(B, R, hop)
    rows_p = jnp.pad(rows, ((0, 0), (r - 1, T_pad + halo_blk - (r - 1) - R), (0, 0)))

    kernel = functools.partial(_stft_kernel, hop=hop, r=r, tile_t=tile_t, num_frames=T)

    vmem_bytes = 4 * (2 * FL * FL                       # basis (+ fallback double buffer)
                      + 4 * (tile_t + halo_blk) * hop   # rows + halo, double-buffered
                      + 2 * tile_t * hop                # output, double-buffered
                      + 4 * (tile_t + r) * FL)          # contrib temporaries
    vmem_limit = int(min(2 * vmem_bytes + (8 << 20), 64 << 20))

    rows_spec = pl.BlockSpec((1, tile_t, hop), lambda b, t: (b, t, 0))
    halo_spec = pl.BlockSpec((1, halo_blk, hop),
                             lambda b, t: (b, (t + 1) * (tile_t // halo_blk), 0))
    out_spec = pl.BlockSpec((1, tile_t, hop), lambda b, t: (b, t, 0))
    # TODO(synk): for hop < 128 regroup output rows into >=128-lane slabs to avoid
    # masked vst writeback (the module defaults hop=512 are already lane-dense).

    def run(single_buffer_basis):
        if single_buffer_basis:
            basis_spec = pl.BlockSpec((FL, FL), lambda b, t: (0, 0),
                                      pipeline_mode=pl.Buffered(1))
        else:
            basis_spec = pl.BlockSpec((FL, FL), lambda b, t: (0, 0))
        out_rows = pl.pallas_call(
            kernel,
            out_shape=jax.ShapeDtypeStruct((B, T_pad, hop), jnp.float32),
            grid_spec=pltpu.PrefetchScalarGridSpec(
                num_scalar_prefetch=0,
                grid=(B, num_tiles),
                in_specs=[rows_spec, halo_spec, basis_spec],
                out_specs=out_spec),
            compiler_params=pltpu.CompilerParams(
                dimension_semantics=("parallel", "parallel"),
                vmem_limit_bytes=vmem_limit),
        )(rows_p, rows_p, basis)
        return jax.block_until_ready(out_rows)

    try:
        out_rows = run(True)            # constant basis single-buffered in VMEM
    except Exception:                   # fallback if pipeline_mode is unavailable
        out_rows = run(False)

    # conv_transpose1d output is (T-1)*hop + FL samples; crop [FL:FL+N] as inverse() does.
    full = out_rows.reshape(B, T_pad * hop)
    return full[:, FL:FL + N].reshape(B, 1, N)


def stft_forward_ref(x, filter_length=16, hop_length=8):
    """Pure-JAX reference implementing the module's math literally (with the
    sqrt/atan2/cos/sin round trip) for a numerical sanity check."""
    B, N = x.shape
    FL, hop = filter_length, hop_length
    fwd, inv, C = _make_stft_bases(FL, hop)
    T = (N + FL) // hop + 1
    x_pad = jnp.pad(x.astype(jnp.float32), ((0, 0), (FL, FL)))
    idx = hop * jnp.arange(T)[:, None] + jnp.arange(FL)[None, :]
    frames = x_pad[:, idx]                                         # (B, T, FL)
    S = jnp.einsum("btk,ck->btc", frames, jnp.asarray(fwd))        # (B, T, 2C)
    real, imag = S[..., :C], S[..., C:]
    mag = jnp.sqrt(real * real + imag * imag)
    phase = jnp.arctan2(imag, real)
    recomb = jnp.concatenate([mag * jnp.cos(phase), mag * jnp.sin(phase)], axis=-1)
    contrib = jnp.einsum("btc,ck->btk", recomb, jnp.asarray(inv))  # (B, T, FL)
    out_len = (T - 1) * hop + FL
    out = jnp.zeros((B, out_len), jnp.float32)
    for t in range(T):
        out = out.at[:, t * hop:t * hop + FL].add(contrib[:, t, :])
    return out[:, FL:FL + N].reshape(B, 1, N)


if __name__ == "__main__":
    B, N = 2, 64
    FL, hop = 16, 8   # small but structurally identical to the module defaults (1024/512)
    key = jax.random.PRNGKey(0)
    x = jax.random.normal(key, (B, N), dtype=jnp.float32)

    ref = stft_forward_ref(x, FL, hop)

    # Multi-tile path (tile_t=8 -> two time tiles: exercises halo + edge masking).
    out_tiled = jax.block_until_ready(stft_forward(x, FL, hop, tile_t=8))
    assert out_tiled.shape == (B, 1, N), out_tiled.shape
    np.testing.assert_allclose(np.asarray(out_tiled), np.asarray(ref), rtol=2e-3, atol=2e-3)

    # Single-tile path (default tile size covers all frames).
    out_single = jax.block_until_ready(stft_forward(x, FL, hop))
    np.testing.assert_allclose(np.asarray(out_single), np.asarray(ref), rtol=2e-3, atol=2e-3)

    print("KERNEL_OK")
</pallas_src>

<mosaic_0001>
module attributes {stable_mosaic.version = 11 : i64} {
  func.func @_stft_kernel(%arg0: i32, %arg1: i32, %arg2: memref<1x8x8xf32, #tpu.memory_space<vmem>>, %arg3: memref<1x8x8xf32, #tpu.memory_space<vmem>>, %arg4: memref<16x16xf32, #tpu.memory_space<vmem>>, %arg5: memref<1x8x8xf32, #tpu.memory_space<vmem>>) attributes {dimension_semantics = [#tpu.dimension_semantics<parallel>, #tpu.dimension_semantics<parallel>], iteration_bounds = array<i64: 2, 2>, scalar_prefetch = 0 : i64, scratch_operands = 0 : i64, tpu.core_type = #tpu.core_type<tc>, window_params = [{transform_indices = @transform_0, window_bounds = array<i64: 1, 8, 8>}, {transform_indices = @transform_1, window_bounds = array<i64: 1, 8, 8>}, {pipeline_mode = #tpu.pipeline_mode<synchronous>, transform_indices = @transform_2, window_bounds = array<i64: 16, 16>}, {transform_indices = @transform_3, window_bounds = array<i64: 1, 8, 8>}]} {
    %c0 = arith.constant 0 : index
    %c0_0 = arith.constant 0 : index
    %c0_1 = arith.constant 0 : index
    %0 = vector.load %arg2[%c0, %c0_0, %c0_1] : memref<1x8x8xf32, #tpu.memory_space<vmem>>, vector<1x8x8xf32>
    %1 = vector.shape_cast %0 : vector<1x8x8xf32> to vector<8x8xf32>
    %c0_2 = arith.constant 0 : index
    %c0_3 = arith.constant 0 : index
    %c0_4 = arith.constant 0 : index
    %2 = vector.load %arg3[%c0_2, %c0_3, %c0_4] : memref<1x8x8xf32, #tpu.memory_space<vmem>>, vector<1x8x8xf32>
    %3 = vector.shape_cast %2 : vector<1x8x8xf32> to vector<8x8xf32>
    %4 = tpu.concatenate %1, %3 in 0 : vector<8x8xf32>, vector<8x8xf32> -> vector<16x8xf32>
    %5 = vector.extract_strided_slice %4 {offsets = [0, 0], sizes = [9, 8], strides = [1, 1]} : vector<16x8xf32> to vector<9x8xf32>
    %c0_5 = arith.constant 0 : index
    %c0_6 = arith.constant 0 : index
    %6 = vector.load %arg4[%c0_5, %c0_6] : memref<16x16xf32, #tpu.memory_space<vmem>>, vector<8x16xf32>
    %cst = arith.constant dense<0.000000e+00> : vector<9x16xf32>
    %7 = tpu.matmul %5, %6, %cst {dimension_numbers = #tpu.dot_dimension_numbers<[1], [0], [0], [1], [0, 0, 1, 1], [], []>} : vector<9x8xf32>, vector<8x16xf32>, vector<9x16xf32> -> vector<9x16xf32>
    %8 = vector.extract_strided_slice %4 {offsets = [1, 0], sizes = [9, 8], strides = [1, 1]} : vector<16x8xf32> to vector<9x8xf32>
    %c8 = arith.constant 8 : index
    %c0_7 = arith.constant 0 : index
    %9 = vector.load %arg4[%c8, %c0_7] : memref<16x16xf32, #tpu.memory_space<vmem>>, vector<8x16xf32>
    %cst_8 = arith.constant dense<0.000000e+00> : vector<9x16xf32>
    %10 = tpu.matmul %8, %9, %cst_8 {dimension_numbers = #tpu.dot_dimension_numbers<[1], [0], [0], [1], [0, 0, 1, 1], [], []>} : vector<9x8xf32>, vector<8x16xf32>, vector<9x16xf32> -> vector<9x16xf32>
    %11 = arith.addf %7, %10 : vector<9x16xf32>
    %12 = tpu.iota {dimensions = array<i32: 0>} : vector<9x1xi32>
    %c8_i32 = arith.constant 8 : i32
    %13 = arith.muli %arg1, %c8_i32 : i32
    %c1_i32 = arith.constant 1 : i32
    %14 = arith.subi %13, %c1_i32 : i32
    %15 = vector.broadcast %14 : i32 to vector<9x1xi32>
    %16 = arith.addi %15, %12 : vector<9x1xi32>
    %c0_i32 = arith.constant 0 : i32
    %17 = vector.broadcast %c0_i32 : i32 to vector<9x1xi32>
    %18 = arith.cmpi sge, %16, %17 : vector<9x1xi32>
    %c11_i32 = arith.constant 11 : i32
    %19 = vector.broadcast %c11_i32 : i32 to vector<9x1xi32>
    %20 = arith.cmpi slt, %16, %19 : vector<9x1xi32>
    %21 = arith.andi %18, %20 : vector<9x1xi1>
    %cst_9 = arith.constant 0.000000e+00 : f32
    %22 = vector.shape_cast %21 : vector<9x1xi1> to vector<9x1xi1>
    %23 = vector.broadcast %22 : vector<9x1xi1> to vector<9x16xi1>
    %24 = vector.broadcast %cst_9 : f32 to vector<9x16xf32>
    %25 = arith.select %23, %11, %24 : vector<9x16xi1>, vector<9x16xf32>
    %26 = vector.extract_strided_slice %25 {offsets = [1, 0], sizes = [8, 8], strides = [1, 1]} : vector<9x16xf32> to vector<8x8xf32>
    %27 = vector.extract_strided_slice %25 {offsets = [0, 8], sizes = [8, 8], strides = [1, 1]} : vector<9x16xf32> to vector<8x8xf32>
    %28 = arith.addf %26, %27 : vector<8x8xf32>
    %c0_10 = arith.constant 0 : index
    %c0_11 = arith.constant 0 : index
    %c0_12 = arith.constant 0 : index
    %29 = vector.load %arg5[%c0_10, %c0_11, %c0_12] : memref<1x8x8xf32, #tpu.memory_space<vmem>>, vector<1x8x8xf32>
    %30 = vector.shape_cast %29 : vector<1x8x8xf32> to vector<8x8xf32>
    %31 = vector.shape_cast %28 : vector<8x8xf32> to vector<1x8x8xf32>
    tpu.vector_store %arg5[%c0_10, %c0_11, %c0_12], %31 {strides = array<i32>} : memref<1x8x8xf32, #tpu.memory_space<vmem>>, vector<1x8x8xf32>,
    return
  }
  func.func @transform_0(%arg0: i32, %arg1: i32) -> (i32, i32, i32) {
    %c0_i32 = arith.constant 0 : i32
    %c0_i32_0 = arith.constant 0 : i32
    return %arg0, %arg1, %c0_i32 : i32, i32, i32
  }
  func.func @transform_1(%arg0: i32, %arg1: i32) -> (i32, i32, i32) {
    %c1_i32 = arith.constant 1 : i32
    %0 = arith.addi %arg1, %c1_i32 : i32
    %c1_i32_0 = arith.constant 1 : i32
    %1 = arith.muli %0, %c1_i32_0 : i32
    %c0_i32 = arith.constant 0 : i32
    %c0_i32_1 = arith.constant 0 : i32
    return %arg0, %1, %c0_i32 : i32, i32, i32
  }
  func.func @transform_2(%arg0: i32, %arg1: i32) -> (i32, i32) {
    %c0_i32 = arith.constant 0 : i32
    %c0_i32_0 = arith.constant 0 : i32
    %c0_i32_1 = arith.constant 0 : i32
    return %c0_i32, %c0_i32_0 : i32, i32
  }
  func.func @transform_3(%arg0: i32, %arg1: i32) -> (i32, i32, i32) {
    %c0_i32 = arith.constant 0 : i32
    %c0_i32_0 = arith.constant 0 : i32
    return %arg0, %arg1, %c0_i32 : i32, i32, i32
  }
}

module attributes {stable_mosaic.version = 11 : i64} {
  func.func @_stft_kernel(%arg0: i32, %arg1: i32, %arg2: memref<1x8x8xf32, #tpu.memory_space<vmem>>, %arg3: memref<1x8x8xf32, #tpu.memory_space<vmem>>, %arg4: memref<16x16xf32, #tpu.memory_space<vmem>>, %arg5: memref<1x8x8xf32, #tpu.memory_space<vmem>>) attributes {dimension_semantics = [#tpu.dimension_semantics<parallel>, #tpu.dimension_semantics<parallel>], iteration_bounds = array<i64: 2, 2>, scalar_prefetch = 0 : i64, scratch_operands = 0 : i64, tpu.core_type = #tpu.core_type<tc>, window_params = [{transform_indices = @transform_0, window_bounds = array<i64: 1, 8, 8>}, {transform_indices = @transform_1, window_bounds = array<i64: 1, 8, 8>}, {pipeline_mode = #tpu.pipeline_mode<synchronous>, transform_indices = @transform_2, window_bounds = array<i64: 16, 16>}, {transform_indices = @transform_3, window_bounds = array<i64: 1, 8, 8>}]} {
    %c0 = arith.constant 0 : index
    %c0_0 = arith.constant 0 : index
    %c0_1 = arith.constant 0 : index
    %0 = vector.load %arg2[%c0, %c0_0, %c0_1] : memref<1x8x8xf32, #tpu.memory_space<vmem>>, vector<1x8x8xf32>
    %1 = vector.shape_cast %0 : vector<1x8x8xf32> to vector<8x8xf32>
    %c0_2 = arith.constant 0 : index
    %c0_3 = arith.constant 0 : index
    %c0_4 = arith.constant 0 : index
    %2 = vector.load %arg3[%c0_2, %c0_3, %c0_4] : memref<1x8x8xf32, #tpu.memory_space<vmem>>, vector<1x8x8xf32>
    %3 = vector.shape_cast %2 : vector<1x8x8xf32> to vector<8x8xf32>
    %4 = tpu.concatenate %1, %3 in 0 : vector<8x8xf32>, vector<8x8xf32> -> vector<16x8xf32>
    %5 = vector.extract_strided_slice %4 {offsets = [0, 0], sizes = [9, 8], strides = [1, 1]} : vector<16x8xf32> to vector<9x8xf32>
    %c0_5 = arith.constant 0 : index
    %c0_6 = arith.constant 0 : index
    %6 = vector.load %arg4[%c0_5, %c0_6] : memref<16x16xf32, #tpu.memory_space<vmem>>, vector<8x16xf32>
    %cst = arith.constant dense<0.000000e+00> : vector<9x16xf32>
    %7 = tpu.matmul %5, %6, %cst {dimension_numbers = #tpu.dot_dimension_numbers<[1], [0], [0], [1], [0, 0, 1, 1], [], []>} : vector<9x8xf32>, vector<8x16xf32>, vector<9x16xf32> -> vector<9x16xf32>
    %8 = vector.extract_strided_slice %4 {offsets = [1, 0], sizes = [9, 8], strides = [1, 1]} : vector<16x8xf32> to vector<9x8xf32>
    %c8 = arith.constant 8 : index
    %c0_7 = arith.constant 0 : index
    %9 = vector.load %arg4[%c8, %c0_7] : memref<16x16xf32, #tpu.memory_space<vmem>>, vector<8x16xf32>
    %cst_8 = arith.constant dense<0.000000e+00> : vector<9x16xf32>
    %10 = tpu.matmul %8, %9, %cst_8 {dimension_numbers = #tpu.dot_dimension_numbers<[1], [0], [0], [1], [0, 0, 1, 1], [], []>} : vector<9x8xf32>, vector<8x16xf32>, vector<9x16xf32> -> vector<9x16xf32>
    %11 = arith.addf %7, %10 : vector<9x16xf32>
    %12 = tpu.iota {dimensions = array<i32: 0>} : vector<9x1xi32>
    %c8_i32 = arith.constant 8 : i32
    %13 = arith.muli %arg1, %c8_i32 : i32
    %c1_i32 = arith.constant 1 : i32
    %14 = arith.subi %13, %c1_i32 : i32
    %15 = vector.broadcast %14 : i32 to vector<9x1xi32>
    %16 = arith.addi %15, %12 : vector<9x1xi32>
    %c0_i32 = arith.constant 0 : i32
    %17 = vector.broadcast %c0_i32 : i32 to vector<9x1xi32>
    %18 = arith.cmpi sge, %16, %17 : vector<9x1xi32>
    %c11_i32 = arith.constant 11 : i32
    %19 = vector.broadcast %c11_i32 : i32 to vector<9x1xi32>
    %20 = arith.cmpi slt, %16, %19 : vector<9x1xi32>
    %21 = arith.andi %18, %20 : vector<9x1xi1>
    %cst_9 = arith.constant 0.000000e+00 : f32
    %22 = vector.shape_cast %21 : vector<9x1xi1> to vector<9x1xi1>
    %23 = vector.broadcast %22 : vector<9x1xi1> to vector<9x16xi1>
    %24 = vector.broadcast %cst_9 : f32 to vector<9x16xf32>
    %25 = arith.select %23, %11, %24 : vector<9x16xi1>, vector<9x16xf32>
    %26 = vector.extract_strided_slice %25 {offsets = [1, 0], sizes = [8, 8], strides = [1, 1]} : vector<9x16xf32> to vector<8x8xf32>
    %27 = vector.extract_strided_slice %25 {offsets = [0, 8], sizes = [8, 8], strides = [1, 1]} : vector<9x16xf32> to vector<8x8xf32>
    %28 = arith.addf %26, %27 : vector<8x8xf32>
    %c0_10 = arith.constant 0 : index
    %c0_11 = arith.constant 0 : index
    %c0_12 = arith.constant 0 : index
    %29 = vector.load %arg5[%c0_10, %c0_11, %c0_12] : memref<1x8x8xf32, #tpu.memory_space<vmem>>, vector<1x8x8xf32>
    %30 = vector.shape_cast %29 : vector<1x8x8xf32> to vector<8x8xf32>
    %31 = vector.shape_cast %28 : vector<8x8xf32> to vector<1x8x8xf32>
    tpu.vector_store %arg5[%c0_10, %c0_11, %c0_12], %31 {strides = array<i32>} : memref<1x8x8xf32, #tpu.memory_space<vmem>>, vector<1x8x8xf32>,
    return
  }
  func.func @transform_0(%arg0: i32, %arg1: i32) -> (i32, i32, i32) {
    %c0_i32 = arith.constant 0 : i32
    %c0_i32_0 = arith.constant 0 : i32
    return %arg0, %arg1, %c0_i32 : i32, i32, i32
  }
  func.func @transform_1(%arg0: i32, %arg1: i32) -> (i32, i32, i32) {
    %c1_i32 = arith.constant 1 : i32
    %0 = arith.addi %arg1, %c1_i32 : i32
    %c1_i32_0 = arith.constant 1 : i32
    %1 = arith.muli %0, %c1_i32_0 : i32
    %c0_i32 = arith.constant 0 : i32
    %c0_i32_1 = arith.constant 0 : i32
    return %arg0, %1, %c0_i32 : i32, i32, i32
  }
  func.func @transform_2(%arg0: i32, %arg1: i32) -> (i32, i32) {
    %c0_i32 = arith.constant 0 : i32
    %c0_i32_0 = arith.constant 0 : i32
    %c0_i32_1 = arith.constant 0 : i32
    return %c0_i32, %c0_i32_0 : i32, i32
  }
  func.func @transform_3(%arg0: i32, %arg1: i32) -> (i32, i32, i32) {
    %c0_i32 = arith.constant 0 : i32
    %c0_i32_0 = arith.constant 0 : i32
    return %arg0, %arg1, %c0_i32 : i32, i32, i32
  }
}

</mosaic_0001>

<llo_original>
// kernel: tpu_custom_call.1
$region0: #{tpu_custom_call.1}
  #allocation0 [shape = 'u32[]', space=smem, size = 0x4, offset = 0x4, fixed_abs, tag = 'smem constant byte address 0x4 - core index']
  #allocation1 [shape = 'u32[72,128]{1,0:T(1,128)}', space=vmem, size = 0x9000, scoped, tag = 'internal scratch']
  %s0 = inlined_call_operand.vmem [shape: f32[2,24,8], index: 0, kind: input, shape index: {}]
  %s1 = inlined_call_operand.vmem [shape: f32[2,24,8], index: 1, kind: input, shape index: {}]
  %s2 = inlined_call_operand.vmem [shape: f32[16,16], index: 2, kind: input, shape index: {}]
  %s3 = inlined_call_operand.vmem [shape: f32[2,16,8], index: 3, kind: output, shape index: {}]
  %s4 = sld [smem:[#allocation0]]
  $region45: #{tpu_custom_call.1} parent=0
    _
  %s6 = ssub.s32 1, %s4
  %s7 = scalar_select 0, %s6, %s4
  loop: start=0, step=1, limit=6
  $region2: #{tpu_custom_call.1} parent=0 // loop_pre_header
    _
  $region3: #{tpu_custom_call.1} parent=0 // loop_header
    %s9 = sphi 0, %s13
    %p10 = scmp.ge.s32.totalorder %s9, 6
    %s16 = sphi 0, %s28
    %s17 = sphi 0, %s24
    %s18 = sphi 0, %s16
    %s19 = sphi 0, %s17
    %s20 = sphi 0, %s18
    %s21 = sphi 0, %s19
    %s33 = sphi 0, %s35
    %s36 = sphi 0, %s33
    %s37 = sphi 0, %s36
    %s53 = sphi 0, %s37
    %s63 = sphi 0, %s65
    %s66 = sphi 0, %s63
    %s67 = sphi 0, %s66
    %s83 = sphi 0, %s67
    %s87 = sphi 0, %s87
    %s89 = sphi 0, %s87
    %s90 = sphi 0, %s89
    %s104 = sphi 0, %s90
    %s112 = sphi 0, %s114
    %s115 = sphi 0, %s112
    %s116 = sphi 0, %s115
    %s132 = sphi 0, %s116
  $region4: #{tpu_custom_call.1} parent=0 // loop_header_branch
    %12 = sbr.rel (%p10) target = $region8
  $region5: #{tpu_custom_call.1} parent=0 // loop_body
    %s14 = ssub.s32 %s9, 1
    %s15 = ssub.s32 %s9, 2
    %s22 = sadd.s32 1, %s17
    %p23 = scmp.ge.s32.totalorder %s22, 2
    %s24 = scalar_select %p23, 0, %s22
    %s25 = sadd.s32 1, %s16
    %s26 = scalar_select %p23, %s25, %s16
    %p27 = scmp.ge.s32.totalorder %s26, 2
    %s28 = scalar_select %p27, 0, %s26
    %s29 = ssub.s32 %s16, %s28
    %s30 = ssub.s32 %s17, %s24
    %s31 = sor.u32 %s29, %s30
    %p32 = scmp.eq.s32.totalorder %s31, 0
    %s34 = sadd.s32 %s33, 1
    %s35 = scalar_select %p32, %s33, %s34
    %p38 = pneg %p32
    %p39 = scmp.eq.s32.totalorder %s9, 3
    %p40 = por %p38, %p39
    %p41 = scmp.ne.s32.totalorder %s33, %s36
    %p42 = scmp.eq.s32.totalorder %s9, 0
    %p43 = por %p41, %p42
    %p44 = scmp.ne.s32.totalorder %s33, %s36
    %p45 = scmp.eq.s32.totalorder %s14, 3
    %p46 = por %p44, %p45
    %p47 = scmp.ne.s32.totalorder %s36, %s37
    %p48 = scmp.eq.s32.totalorder %s14, 0
    %p49 = por %p47, %p48
    %p50 = scmp.ne.s32.totalorder %s36, %s37
    %p51 = scmp.eq.s32.totalorder %s15, 3
    %p52 = por %p50, %p51
    %p54 = scmp.ne.s32.totalorder %s37, %s53
    %p55 = scmp.eq.s32.totalorder %s15, 0
    %p56 = por %p54, %p55
    %s57 = sadd.s32 %s17, 1
    %s58 = sadd.s32 %s24, 1
    %s59 = ssub.s32 %s16, %s28
    %s60 = ssub.s32 %s57, %s58
    %s61 = sor.u32 %s59, %s60
    %p62 = scmp.eq.s32.totalorder %s61, 0
    %s64 = sadd.s32 %s63, 1
    %s65 = scalar_select %p62, %s63, %s64
    %p68 = pneg %p62
    %p69 = scmp.eq.s32.totalorder %s9, 3
    %p70 = por %p68, %p69
    %p71 = scmp.ne.s32.totalorder %s63, %s66
    %p72 = scmp.eq.s32.totalorder %s9, 0
    %p73 = por %p71, %p72
    %p74 = scmp.ne.s32.totalorder %s63, %s66
    %p75 = scmp.eq.s32.totalorder %s14, 3
    %p76 = por %p74, %p75
    %p77 = scmp.ne.s32.totalorder %s66, %s67
    %p78 = scmp.eq.s32.totalorder %s14, 0
    %p79 = por %p77, %p78
    %p80 = scmp.ne.s32.totalorder %s66, %s67
    %p81 = scmp.eq.s32.totalorder %s15, 3
    %p82 = por %p80, %p81
    %p84 = scmp.ne.s32.totalorder %s67, %s83
    %p85 = scmp.eq.s32.totalorder %s15, 0
    %p86 = por %p84, %p85
    %s88 = sadd.s32 %s87, 1
    %p91 = scmp.eq.s32.totalorder %s9, 3
    %p92 = scmp.ne.s32.totalorder %s87, %s89
    %p93 = scmp.eq.s32.totalorder %s9, 0
    %p94 = por %p92, %p93
    %p95 = scmp.ne.s32.totalorder %s87, %s89
    %p96 = scmp.eq.s32.totalorder %s14, 3
    %p97 = por %p95, %p96
    %p98 = scmp.ne.s32.totalorder %s89, %s90
    %p99 = scmp.eq.s32.totalorder %s14, 0
    %p100 = por %p98, %p99
    %p101 = scmp.ne.s32.totalorder %s89, %s90
    %p102 = scmp.eq.s32.totalorder %s15, 3
    %p103 = por %p101, %p102
    %p105 = scmp.ne.s32.totalorder %s90, %s104
    %p106 = scmp.eq.s32.totalorder %s15, 0
    %p107 = por %p105, %p106
    %s108 = ssub.s32 %s16, %s28
    %s109 = ssub.s32 %s17, %s24
    %s110 = sor.u32 %s108, %s109
    %p111 = scmp.eq.s32.totalorder %s110, 0
    %s113 = sadd.s32 %s112, 1
    %s114 = scalar_select %p111, %s112, %s113
    %p117 = pneg %p111
    %p118 = scmp.eq.s32.totalorder %s9, 3
    %p119 = por %p117, %p118
    %p120 = scmp.ne.s32.totalorder %s112, %s115
    %p121 = scmp.eq.s32.totalorder %s9, 0
    %p122 = por %p120, %p121
    %p123 = scmp.ne.s32.totalorder %s112, %s115
    %p124 = scmp.eq.s32.totalorder %s14, 3
    %p125 = por %p123, %p124
    %p126 = scmp.ne.s32.totalorder %s115, %s116
    %p127 = scmp.eq.s32.totalorder %s14, 0
    %p128 = por %p126, %p127
    %p129 = scmp.ne.s32.totalorder %s115, %s116
    %p130 = scmp.eq.s32.totalorder %s15, 3
    %p131 = por %p129, %p130
    %p133 = scmp.ne.s32.totalorder %s116, %s132
    %p134 = scmp.eq.s32.totalorder %s15, 0
    %p135 = por %p133, %p134
    %p136 = scmp.le.s32.totalorder 1, %s9
    %p137 = scmp.lt.s32.totalorder %s9, 5
    %p138 = pnand %p136, %p137
    %p139 = pneg %p138
    // Predicated region
    $region9: #{tpu_custom_call.1} parent=5 // pred_check
      _
    $region10: #{tpu_custom_call.1} parent=5 // pred_check_branch
      %141 = sbr.rel (%p138) target = $region12
    $region11: #{tpu_custom_call.1} parent=5 // pred_region
      %s142 = ssub.s32 %s9, 1
      // Predicated region
      $region13: #{tpu_custom_call.1} parent=11 // pred_check
        %p143 = pneg %p100
      $region14: #{tpu_custom_call.1} parent=11 // pred_check_branch
        %145 = sbr.rel (%p143) target = $region16
      $region15: #{tpu_custom_call.1} parent=11 // pred_region
        _
      $region16: #{tpu_custom_call.1} parent=11 // pred_fallthru
        _
    $region12: #{tpu_custom_call.1} parent=5 // pred_fallthru
      _
    %p146 = scmp.lt.s32.totalorder %s9, 4
    // Predicated region
    $region17: #{tpu_custom_call.1} parent=5 // pred_check
      %p147 = pneg %p146
    $region18: #{tpu_custom_call.1} parent=5 // pred_check_branch
      %149 = sbr.rel (%p147) target = $region20
    $region19: #{tpu_custom_call.1} parent=5 // pred_region
      // Predicated region
      $region21: #{tpu_custom_call.1} parent=19 // pred_check
        %p150 = pneg %p43
      $region22: #{tpu_custom_call.1} parent=19 // pred_check_branch
        %152 = sbr.rel (%p150) target = $region24
      $region23: #{tpu_custom_call.1} parent=19 // pred_region
        %p153 = scmp.lt.s32.totalorder %s16, 1
        %s154 = scalar_select %p153, %s16, 1
        %p155 = scmp.lt.s32.totalorder %s17, 2
        %s156 = scalar_select %p155, %s17, 2
        %s157 = smul.addr %s154, 3
        %s158 = sadd.s32 %s156, %s157
        %s159 = smul.addr %s158, 8
        %s160 = scalar_lea.vmem %s0, %s159
      $region24: #{tpu_custom_call.1} parent=19 // pred_fallthru
        _
      // Predicated region
      $region25: #{tpu_custom_call.1} parent=19 // pred_check
        %p161 = pneg %p73
      $region26: #{tpu_custom_call.1} parent=19 // pred_check_branch
        %163 = sbr.rel (%p161) target = $region28
      $region27: #{tpu_custom_call.1} parent=19 // pred_region
        %s164 = sadd.s32 %s17, 1
        %p165 = scmp.lt.s32.totalorder %s16, 1
        %s166 = scalar_select %p165, %s16, 1
        %p167 = scmp.lt.s32.totalorder %s164, 2
        %s168 = scalar_select %p167, %s164, 2
        %s169 = smul.addr %s166, 3
        %s170 = sadd.s32 %s168, %s169
        %s171 = smul.addr %s170, 8
        %s172 = scalar_lea.vmem %s1, %s171
        %s173 = sadd.s32 %s17, 1
      $region28: #{tpu_custom_call.1} parent=19 // pred_fallthru
        _
    $region20: #{tpu_custom_call.1} parent=5 // pred_fallthru
      _
    %p174 = scmp.le.s32.totalorder 1, %s9
    %p175 = scmp.lt.s32.totalorder %s9, 5
    %p176 = pnand %p174, %p175
    %p177 = pneg %p176
    // Predicated region
    $region29: #{tpu_custom_call.1} parent=5 // pred_check
      _
    $region30: #{tpu_custom_call.1} parent=5 // pred_check_branch
      %179 = sbr.rel (%p176) target = $region32
    $region31: #{tpu_custom_call.1} parent=5 // pred_region
      %s180 = ssub.s32 %s9, 1
      %p181 = scmp.lt.s32.totalorder %s18, 1
      %s182 = scalar_select %p181, %s18, 1
      %p183 = scmp.lt.s32.totalorder %s19, 2
      %s184 = scalar_select %p183, %s19, 2
      %s185 = smul.addr %s182, 3
      %s186 = sadd.s32 %s184, %s185
      %s187 = smul.addr %s186, 8
      %s188 = scalar_lea.vmem %s0, %s187
      %p189 = pneg %p49
      %p190 = pneg %p46
      %s191 = sadd.s32 %s19, 1
      %p192 = scmp.lt.s32.totalorder %s18, 1
      %s193 = scalar_select %p192, %s18, 1
      %p194 = scmp.lt.s32.totalorder %s191, 2
      %s195 = scalar_select %p194, %s191, 2
      %s196 = smul.addr %s193, 3
      %s197 = sadd.s32 %s195, %s196
      %s198 = smul.addr %s197, 8
      %s199 = scalar_lea.vmem %s1, %s198
      %p200 = pneg %p79
      %p201 = pneg %p76
      %p202 = pneg %p100
      %p203 = pneg %p97
      %p204 = pneg %p128
      %p205 = pneg %p125
      %p206 = scmp.lt.s32.totalorder %s18, 1
      %s207 = scalar_select %p206, %s18, 1
      %p208 = scmp.lt.s32.totalorder %s19, 1
      %s209 = scalar_select %p208, %s19, 1
      %s210 = smul.addr %s207, 2
      %s211 = sadd.s32 %s209, %s210
      %s212 = smul.addr %s211, 8
      %s213 = scalar_lea.vmem %s3, %s212
      %p214 = scmp.lt.s32.totalorder %s18, 1
      %s215 = scalar_select %p214, %s18, 1
      %p216 = scmp.lt.s32.totalorder %s19, 2
      %s217 = scalar_select %p216, %s19, 2
      %s218 = smul.addr %s215, 3
      %s219 = sadd.s32 %s217, %s218
      %s220 = smul.addr %s219, 8
      %s221 = scalar_lea.vmem %s0, %s220
      %s222 = sadd.s32 %s19, 1
      %p223 = scmp.lt.s32.totalorder %s18, 1
      %s224 = scalar_select %p223, %s18, 1
      %p225 = scmp.lt.s32.totalorder %s222, 2
      %s226 = scalar_select %p225, %s222, 2
      %s227 = smul.addr %s224, 3
      %s228 = sadd.s32 %s226, %s227
      %s229 = smul.addr %s228, 8
      %s230 = scalar_lea.vmem %s1, %s229
      %s231 = sadd.s32 %s19, 1
      %p232 = scmp.lt.s32.totalorder %s18, 1
      %s233 = scalar_select %p232, %s18, 1
      %p234 = scmp.lt.s32.totalorder %s19, 1
      %s235 = scalar_select %p234, %s19, 1
      %s236 = smul.addr %s233, 2
      %s237 = sadd.s32 %s235, %s236
      %s238 = smul.addr %s237, 8
      %s239 = scalar_lea.vmem %s3, %s238
      %v240 = vld [vmem:[%s221] sm:$0xff]
      %v241 = vld [vmem:[%s230] sm:$0xff]
      %v242 = vld [vmem:[%s2] sm:$0xff]
      %v243 = vld [vmem:[%s2 + $0x8] sm:$0xff]
      %vm246 = vcmask 1046528
      %v247 = vrot.slane %v240, 1
      %v248 = vrot.slane %v241, 1
      %v249 = vsel %vm246, %v247, %v248
      %vm250 = vcmask 64512
      %v251 = vsel %vm250, %v249, 0
      %v253 = vsel %vm250, %v248, 0
      %255 = vmatpush.msra.mxu0 0.0
      %256 = vmatpush.msra.mxu0 0.0
      %257 = vmatpush.msra.mxu0 0.0
      %258 = vmatpush.msra.mxu0 0.0
      %259 = vmatpush.msra.mxu0 0.0
      %260 = vmatpush.msra.mxu0 0.0
      %261 = vmatpush.msra.mxu0 0.0
      %262 = vmatpush.msra.mxu0 0.0
      %263 = vmatpush.msra.mxu0 0.0
      %264 = vmatpush.msra.mxu0 0.0
      %265 = vmatpush.msra.mxu0 0.0
      %266 = vmatpush.msra.mxu0 0.0
      %267 = vmatpush.msra.mxu0 0.0
      %268 = vmatpush.msra.mxu0 0.0
      %269 = vmatpush.msra.mxu0 0.0
      %270 = vmatpush.msra.mxu0 %v243
      %271 = vmatmul.f32.gmra.mxu0 %v251
      %v272 = vpop.f32.mrf.mxu0
      %v273 = vadd.f32 0.0, %v272
      %274 = vmatmul.f32.gmra.mxu0 %v253
      %v275 = vpop.f32.mrf.mxu0
      %v276 = vadd.f32 0.0, %v275
      %277 = vdwg.mxu0
      %v278 = vsel %vm250, %v240, 0
      %v280 = vsel %vm250, %v241, 0
      %282 = vmatpush.msra.mxu0 0.0
      %283 = vmatpush.msra.mxu0 0.0
      %284 = vmatpush.msra.mxu0 0.0
      %285 = vmatpush.msra.mxu0 0.0
      %286 = vmatpush.msra.mxu0 0.0
      %287 = vmatpush.msra.mxu0 0.0
      %288 = vmatpush.msra.mxu0 0.0
      %289 = vmatpush.msra.mxu0 0.0
      %290 = vmatpush.msra.mxu0 0.0
      %291 = vmatpush.msra.mxu0 0.0
      %292 = vmatpush.msra.mxu0 0.0
      %293 = vmatpush.msra.mxu0 0.0
      %294 = vmatpush.msra.mxu0 0.0
      %295 = vmatpush.msra.mxu0 0.0
      %296 = vmatpush.msra.mxu0 0.0
      %297 = vmatpush.msra.mxu0 %v242
      %298 = vmatmul.f32.gmra.mxu0 %v278
      %v299 = vpop.f32.mrf.mxu0
      %v300 = vadd.f32 %v273, %v299
      %301 = vmatmul.f32.gmra.mxu0 %v280
      %v302 = vpop.f32.mrf.mxu0
      %v303 = vadd.f32 %v276, %v302
      %304 = vdwg.mxu0
      %v305 = vlaneseq
      %v306 = vshrl.u32 %v305, 7
      %v307 = vadd.s32 %v306, 8
      %s308 = smul.u32 %s19, 8
      %s309 = ssub.s32 %s308, 1
      %v310 = vstv %s309
      %v311 = vadd.s32 %v310, %v306
      %v312 = vadd.s32 %v310, %v307
      %vm313 = vcmp.ge.s32.totalorder %v311, 0
      %vm314 = vcmp.ge.s32.totalorder %v312, 0
      %vm315 = vcmp.lt.s32.totalorder %v311, 11
      %vm316 = vcmp.lt.s32.totalorder %v312, 11
      %vm317 = vmand %vm313, %vm315
      %vm318 = vmand %vm314, %vm316
      %v319 = vsel %vm317, 1, 0
      %v320 = vsel %vm318, 1, 0
      %vm321 = vcmp.eq.s32.totalorder %v319, 1
      %vm322 = vcmp.eq.s32.totalorder %v320, 1
      %v323 = vsel %vm321, %v300, 0.0
      %v324 = vsel %vm322, %v303, 0.0
      %v326 = vrot.slane %v323, 7
      %327 = vrot.lane.b32.xlu0 %v326, 120
      %v328 = vpop.permute.xlu0 %327
      %v330 = vadd.f32 %v323, %v328
      %v331 = vadd.f32 %v324, %v328
      %vm332 = vcmask 64513
      %333 = vst.msk [vmem:[%s239 - $0x1] sm:$0xfe] %vm332, %v330
      %vm334 = vcmask 57344
      %335 = vst.msk [vmem:[%s239 + $0x7] sm:$0x1] %vm334, %v331
      %p336 = scmp.lt.s32.totalorder %s18, 1
      %s337 = scalar_select %p336, %s18, 1
      %p338 = scmp.lt.s32.totalorder %s19, 1
      %s339 = scalar_select %p338, %s19, 1
      %s340 = smul.addr %s337, 2
      %s341 = sadd.s32 %s339, %s340
      %s342 = smul.addr %s341, 8
      %s343 = scalar_lea.vmem %s3, %s342
      // Predicated region
      $region33: #{tpu_custom_call.1} parent=31 // pred_check
        %p344 = pneg %p125
      $region34: #{tpu_custom_call.1} parent=31 // pred_check_branch
        %346 = sbr.rel (%p344) target = $region36
      $region35: #{tpu_custom_call.1} parent=31 // pred_region
        _
      $region36: #{tpu_custom_call.1} parent=31 // pred_fallthru
        _
    $region32: #{tpu_custom_call.1} parent=5 // pred_fallthru
      _
    %p347 = scmp.le.s32.totalorder 2, %s9
    // Predicated region
    $region37: #{tpu_custom_call.1} parent=5 // pred_check
      %p348 = pneg %p347
    $region38: #{tpu_custom_call.1} parent=5 // pred_check_branch
      %350 = sbr.rel (%p348) target = $region40
    $region39: #{tpu_custom_call.1} parent=5 // pred_region
      %s351 = ssub.s32 %s9, 2
      // Predicated region
      $region41: #{tpu_custom_call.1} parent=39 // pred_check
        %p352 = pneg %p131
      $region42: #{tpu_custom_call.1} parent=39 // pred_check_branch
        %354 = sbr.rel (%p352) target = $region44
      $region43: #{tpu_custom_call.1} parent=39 // pred_region
        %p355 = scmp.lt.s32.totalorder %s20, 1
        %s356 = scalar_select %p355, %s20, 1
        %p357 = scmp.lt.s32.totalorder %s21, 1
        %s358 = scalar_select %p357, %s21, 1
        %s359 = smul.addr %s356, 2
        %s360 = sadd.s32 %s358, %s359
        %s361 = smul.addr %s360, 8
        %s362 = scalar_lea.vmem %s3, %s361
      $region44: #{tpu_custom_call.1} parent=39 // pred_fallthru
        _
    $region40: #{tpu_custom_call.1} parent=5 // pred_fallthru
      _
  $region6: #{tpu_custom_call.1} parent=0 // loop_footer
    %s13 = sadd.s32 1, %s9
  $region7: #{tpu_custom_call.1} parent=0 // loop_footer_branch
    %8 = sbr.rel target = $region3
  $region8: #{tpu_custom_call.1} parent=0 // loop_exit
    _

// kernel: tpu_custom_call.1
$region0: #{tpu_custom_call.1}
  #allocation0 [shape = 'u32[]', space=smem, size = 0x4, offset = 0x4, fixed_abs, tag = 'smem constant byte address 0x4 - core index']
  #allocation1 [shape = 'u32[72,128]{1,0:T(1,128)}', space=vmem, size = 0x9000, scoped, tag = 'internal scratch']
  %s0 = inlined_call_operand.vmem [shape: f32[2,24,8], index: 0, kind: input, shape index: {}]
  %s1 = inlined_call_operand.vmem [shape: f32[2,24,8], index: 1, kind: input, shape index: {}]
  %s2 = inlined_call_operand.vmem [shape: f32[16,16], index: 2, kind: input, shape index: {}]
  %s3 = inlined_call_operand.vmem [shape: f32[2,16,8], index: 3, kind: output, shape index: {}]
  %s4 = sld [smem:[#allocation0]]
  $region45: #{tpu_custom_call.1} parent=0
    _
  %s6 = ssub.s32 1, %s4
  %s7 = scalar_select 0, %s6, %s4
  loop: start=0, step=1, limit=6
  $region2: #{tpu_custom_call.1} parent=0 // loop_pre_header
    _
  $region3: #{tpu_custom_call.1} parent=0 // loop_header
    %s9 = sphi 0, %s13
    %p10 = scmp.ge.s32.totalorder %s9, 6
    %s16 = sphi 0, %s28
    %s17 = sphi 0, %s24
    %s18 = sphi 0, %s16
    %s19 = sphi 0, %s17
    %s20 = sphi 0, %s18
    %s21 = sphi 0, %s19
    %s33 = sphi 0, %s35
    %s36 = sphi 0, %s33
    %s37 = sphi 0, %s36
    %s53 = sphi 0, %s37
    %s63 = sphi 0, %s65
    %s66 = sphi 0, %s63
    %s67 = sphi 0, %s66
    %s83 = sphi 0, %s67
    %s87 = sphi 0, %s87
    %s89 = sphi 0, %s87
    %s90 = sphi 0, %s89
    %s104 = sphi 0, %s90
    %s112 = sphi 0, %s114
    %s115 = sphi 0, %s112
    %s116 = sphi 0, %s115
    %s132 = sphi 0, %s116
  $region4: #{tpu_custom_call.1} parent=0 // loop_header_branch
    %12 = sbr.rel (%p10) target = $region8
  $region5: #{tpu_custom_call.1} parent=0 // loop_body
    %s14 = ssub.s32 %s9, 1
    %s15 = ssub.s32 %s9, 2
    %s22 = sadd.s32 1, %s17
    %p23 = scmp.ge.s32.totalorder %s22, 2
    %s24 = scalar_select %p23, 0, %s22
    %s25 = sadd.s32 1, %s16
    %s26 = scalar_select %p23, %s25, %s16
    %p27 = scmp.ge.s32.totalorder %s26, 2
    %s28 = scalar_select %p27, 0, %s26
    %s29 = ssub.s32 %s16, %s28
    %s30 = ssub.s32 %s17, %s24
    %s31 = sor.u32 %s29, %s30
    %p32 = scmp.eq.s32.totalorder %s31, 0
    %s34 = sadd.s32 %s33, 1
    %s35 = scalar_select %p32, %s33, %s34
    %p38 = pneg %p32
    %p39 = scmp.eq.s32.totalorder %s9, 3
    %p40 = por %p38, %p39
    %p41 = scmp.ne.s32.totalorder %s33, %s36
    %p42 = scmp.eq.s32.totalorder %s9, 0
    %p43 = por %p41, %p42
    %p44 = scmp.ne.s32.totalorder %s33, %s36
    %p45 = scmp.eq.s32.totalorder %s14, 3
    %p46 = por %p44, %p45
    %p47 = scmp.ne.s32.totalorder %s36, %s37
    %p48 = scmp.eq.s32.totalorder %s14, 0
    %p49 = por %p47, %p48
    %p50 = scmp.ne.s32.totalorder %s36, %s37
    %p51 = scmp.eq.s32.totalorder %s15, 3
    %p52 = por %p50, %p51
    %p54 = scmp.ne.s32.totalorder %s37, %s53
    %p55 = scmp.eq.s32.totalorder %s15, 0
    %p56 = por %p54, %p55
    %s57 = sadd.s32 %s17, 1
    %s58 = sadd.s32 %s24, 1
    %s59 = ssub.s32 %s16, %s28
    %s60 = ssub.s32 %s57, %s58
    %s61 = sor.u32 %s59, %s60
    %p62 = scmp.eq.s32.totalorder %s61, 0
    %s64 = sadd.s32 %s63, 1
    %s65 = scalar_select %p62, %s63, %s64
    %p68 = pneg %p62
    %p69 = scmp.eq.s32.totalorder %s9, 3
    %p70 = por %p68, %p69
    %p71 = scmp.ne.s32.totalorder %s63, %s66
    %p72 = scmp.eq.s32.totalorder %s9, 0
    %p73 = por %p71, %p72
    %p74 = scmp.ne.s32.totalorder %s63, %s66
    %p75 = scmp.eq.s32.totalorder %s14, 3
    %p76 = por %p74, %p75
    %p77 = scmp.ne.s32.totalorder %s66, %s67
    %p78 = scmp.eq.s32.totalorder %s14, 0
    %p79 = por %p77, %p78
    %p80 = scmp.ne.s32.totalorder %s66, %s67
    %p81 = scmp.eq.s32.totalorder %s15, 3
    %p82 = por %p80, %p81
    %p84 = scmp.ne.s32.totalorder %s67, %s83
    %p85 = scmp.eq.s32.totalorder %s15, 0
    %p86 = por %p84, %p85
    %s88 = sadd.s32 %s87, 1
    %p91 = scmp.eq.s32.totalorder %s9, 3
    %p92 = scmp.ne.s32.totalorder %s87, %s89
    %p93 = scmp.eq.s32.totalorder %s9, 0
    %p94 = por %p92, %p93
    %p95 = scmp.ne.s32.totalorder %s87, %s89
    %p96 = scmp.eq.s32.totalorder %s14, 3
    %p97 = por %p95, %p96
    %p98 = scmp.ne.s32.totalorder %s89, %s90
    %p99 = scmp.eq.s32.totalorder %s14, 0
    %p100 = por %p98, %p99
    %p101 = scmp.ne.s32.totalorder %s89, %s90
    %p102 = scmp.eq.s32.totalorder %s15, 3
    %p103 = por %p101, %p102
    %p105 = scmp.ne.s32.totalorder %s90, %s104
    %p106 = scmp.eq.s32.totalorder %s15, 0
    %p107 = por %p105, %p106
    %s108 = ssub.s32 %s16, %s28
    %s109 = ssub.s32 %s17, %s24
    %s110 = sor.u32 %s108, %s109
    %p111 = scmp.eq.s32.totalorder %s110, 0
    %s113 = sadd.s32 %s112, 1
    %s114 = scalar_select %p111, %s112, %s113
    %p117 = pneg %p111
    %p118 = scmp.eq.s32.totalorder %s9, 3
    %p119 = por %p117, %p118
    %p120 = scmp.ne.s32.totalorder %s112, %s115
    %p121 = scmp.eq.s32.totalorder %s9, 0
    %p122 = por %p120, %p121
    %p123 = scmp.ne.s32.totalorder %s112, %s115
    %p124 = scmp.eq.s32.totalorder %s14, 3
    %p125 = por %p123, %p124
    %p126 = scmp.ne.s32.totalorder %s115, %s116
    %p127 = scmp.eq.s32.totalorder %s14, 0
    %p128 = por %p126, %p127
    %p129 = scmp.ne.s32.totalorder %s115, %s116
    %p130 = scmp.eq.s32.totalorder %s15, 3
    %p131 = por %p129, %p130
    %p133 = scmp.ne.s32.totalorder %s116, %s132
    %p134 = scmp.eq.s32.totalorder %s15, 0
    %p135 = por %p133, %p134
    %p136 = scmp.le.s32.totalorder 1, %s9
    %p137 = scmp.lt.s32.totalorder %s9, 5
    %p138 = pnand %p136, %p137
    %p139 = pneg %p138
    // Predicated region
    $region9: #{tpu_custom_call.1} parent=5 // pred_check
      _
    $region10: #{tpu_custom_call.1} parent=5 // pred_check_branch
      %141 = sbr.rel (%p138) target = $region12
    $region11: #{tpu_custom_call.1} parent=5 // pred_region
      %s142 = ssub.s32 %s9, 1
      // Predicated region
      $region13: #{tpu_custom_call.1} parent=11 // pred_check
        %p143 = pneg %p100
      $region14: #{tpu_custom_call.1} parent=11 // pred_check_branch
        %145 = sbr.rel (%p143) target = $region16
      $region15: #{tpu_custom_call.1} parent=11 // pred_region
        _
      $region16: #{tpu_custom_call.1} parent=11 // pred_fallthru
        _
    $region12: #{tpu_custom_call.1} parent=5 // pred_fallthru
      _
    %p146 = scmp.lt.s32.totalorder %s9, 4
    // Predicated region
    $region17: #{tpu_custom_call.1} parent=5 // pred_check
      %p147 = pneg %p146
    $region18: #{tpu_custom_call.1} parent=5 // pred_check_branch
      %149 = sbr.rel (%p147) target = $region20
    $region19: #{tpu_custom_call.1} parent=5 // pred_region
      // Predicated region
      $region21: #{tpu_custom_call.1} parent=19 // pred_check
        %p150 = pneg %p43
      $region22: #{tpu_custom_call.1} parent=19 // pred_check_branch
        %152 = sbr.rel (%p150) target = $region24
      $region23: #{tpu_custom_call.1} parent=19 // pred_region
        %p153 = scmp.lt.s32.totalorder %s16, 1
        %s154 = scalar_select %p153, %s16, 1
        %p155 = scmp.lt.s32.totalorder %s17, 2
        %s156 = scalar_select %p155, %s17, 2
        %s157 = smul.addr %s154, 3
        %s158 = sadd.s32 %s156, %s157
        %s159 = smul.addr %s158, 8
        %s160 = scalar_lea.vmem %s0, %s159
      $region24: #{tpu_custom_call.1} parent=19 // pred_fallthru
        _
      // Predicated region
      $region25: #{tpu_custom_call.1} parent=19 // pred_check
        %p161 = pneg %p73
      $region26: #{tpu_custom_call.1} parent=19 // pred_check_branch
        %163 = sbr.rel (%p161) target = $region28
      $region27: #{tpu_custom_call.1} parent=19 // pred_region
        %s164 = sadd.s32 %s17, 1
        %p165 = scmp.lt.s32.totalorder %s16, 1
        %s166 = scalar_select %p165, %s16, 1
        %p167 = scmp.lt.s32.totalorder %s164, 2
        %s168 = scalar_select %p167, %s164, 2
        %s169 = smul.addr %s166, 3
        %s170 = sadd.s32 %s168, %s169
        %s171 = smul.addr %s170, 8
        %s172 = scalar_lea.vmem %s1, %s171
        %s173 = sadd.s32 %s17, 1
      $region28: #{tpu_custom_call.1} parent=19 // pred_fallthru
        _
    $region20: #{tpu_custom_call.1} parent=5 // pred_fallthru
      _
    %p174 = scmp.le.s32.totalorder 1, %s9
    %p175 = scmp.lt.s32.totalorder %s9, 5
    %p176 = pnand %p174, %p175
    %p177 = pneg %p176
    // Predicated region
    $region29: #{tpu_custom_call.1} parent=5 // pred_check
      _
    $region30: #{tpu_custom_call.1} parent=5 // pred_check_branch
      %179 = sbr.rel (%p176) target = $region32
    $region31: #{tpu_custom_call.1} parent=5 // pred_region
      %s180 = ssub.s32 %s9, 1
      %p181 = scmp.lt.s32.totalorder %s18, 1
      %s182 = scalar_select %p181, %s18, 1
      %p183 = scmp.lt.s32.totalorder %s19, 2
      %s184 = scalar_select %p183, %s19, 2
      %s185 = smul.addr %s182, 3
      %s186 = sadd.s32 %s184, %s185
      %s187 = smul.addr %s186, 8
      %s188 = scalar_lea.vmem %s0, %s187
      %p189 = pneg %p49
      %p190 = pneg %p46
      %s191 = sadd.s32 %s19, 1
      %p192 = scmp.lt.s32.totalorder %s18, 1
      %s193 = scalar_select %p192, %s18, 1
      %p194 = scmp.lt.s32.totalorder %s191, 2
      %s195 = scalar_select %p194, %s191, 2
      %s196 = smul.addr %s193, 3
      %s197 = sadd.s32 %s195, %s196
      %s198 = smul.addr %s197, 8
      %s199 = scalar_lea.vmem %s1, %s198
      %p200 = pneg %p79
      %p201 = pneg %p76
      %p202 = pneg %p100
      %p203 = pneg %p97
      %p204 = pneg %p128
      %p205 = pneg %p125
      %p206 = scmp.lt.s32.totalorder %s18, 1
      %s207 = scalar_select %p206, %s18, 1
      %p208 = scmp.lt.s32.totalorder %s19, 1
      %s209 = scalar_select %p208, %s19, 1
      %s210 = smul.addr %s207, 2
      %s211 = sadd.s32 %s209, %s210
      %s212 = smul.addr %s211, 8
      %s213 = scalar_lea.vmem %s3, %s212
      %p214 = scmp.lt.s32.totalorder %s18, 1
      %s215 = scalar_select %p214, %s18, 1
      %p216 = scmp.lt.s32.totalorder %s19, 2
      %s217 = scalar_select %p216, %s19, 2
      %s218 = smul.addr %s215, 3
      %s219 = sadd.s32 %s217, %s218
      %s220 = smul.addr %s219, 8
      %s221 = scalar_lea.vmem %s0, %s220
      %s222 = sadd.s32 %s19, 1
      %p223 = scmp.lt.s32.totalorder %s18, 1
      %s224 = scalar_select %p223, %s18, 1
      %p225 = scmp.lt.s32.totalorder %s222, 2
      %s226 = scalar_select %p225, %s222, 2
      %s227 = smul.addr %s224, 3
      %s228 = sadd.s32 %s226, %s227
      %s229 = smul.addr %s228, 8
      %s230 = scalar_lea.vmem %s1, %s229
      %s231 = sadd.s32 %s19, 1
      %p232 = scmp.lt.s32.totalorder %s18, 1
      %s233 = scalar_select %p232, %s18, 1
      %p234 = scmp.lt.s32.totalorder %s19, 1
      %s235 = scalar_select %p234, %s19, 1
      %s236 = smul.addr %s233, 2
      %s237 = sadd.s32 %s235, %s236
      %s238 = smul.addr %s237, 8
      %s239 = scalar_lea.vmem %s3, %s238
      %v240 = vld [vmem:[%s221] sm:$0xff]
      %v241 = vld [vmem:[%s230] sm:$0xff]
      %v242 = vld [vmem:[%s2] sm:$0xff]
      %v243 = vld [vmem:[%s2 + $0x8] sm:$0xff]
      %vm246 = vcmask 1046528
      %v247 = vrot.slane %v240, 1
      %v248 = vrot.slane %v241, 1
      %v249 = vsel %vm246, %v247, %v248
      %vm250 = vcmask 64512
      %v251 = vsel %vm250, %v249, 0
      %v253 = vsel %vm250, %v248, 0
      %255 = vmatpush.msra.mxu0 0.0
      %256 = vmatpush.msra.mxu0 0.0
      %257 = vmatpush.msra.mxu0 0.0
      %258 = vmatpush.msra.mxu0 0.0
      %259 = vmatpush.msra.mxu0 0.0
      %260 = vmatpush.msra.mxu0 0.0
      %261 = vmatpush.msra.mxu0 0.0
      %262 = vmatpush.msra.mxu0 0.0
      %263 = vmatpush.msra.mxu0 0.0
      %264 = vmatpush.msra.mxu0 0.0
      %265 = vmatpush.msra.mxu0 0.0
      %266 = vmatpush.msra.mxu0 0.0
      %267 = vmatpush.msra.mxu0 0.0
      %268 = vmatpush.msra.mxu0 0.0
      %269 = vmatpush.msra.mxu0 0.0
      %270 = vmatpush.msra.mxu0 %v243
      %271 = vmatmul.f32.gmra.mxu0 %v251
      %v272 = vpop.f32.mrf.mxu0
      %v273 = vadd.f32 0.0, %v272
      %274 = vmatmul.f32.gmra.mxu0 %v253
      %v275 = vpop.f32.mrf.mxu0
      %v276 = vadd.f32 0.0, %v275
      %277 = vdwg.mxu0
      %v278 = vsel %vm250, %v240, 0
      %v280 = vsel %vm250, %v241, 0
      %282 = vmatpush.msra.mxu0 0.0
      %283 = vmatpush.msra.mxu0 0.0
      %284 = vmatpush.msra.mxu0 0.0
      %285 = vmatpush.msra.mxu0 0.0
      %286 = vmatpush.msra.mxu0 0.0
      %287 = vmatpush.msra.mxu0 0.0
      %288 = vmatpush.msra.mxu0 0.0
      %289 = vmatpush.msra.mxu0 0.0
      %290 = vmatpush.msra.mxu0 0.0
      %291 = vmatpush.msra.mxu0 0.0
      %292 = vmatpush.msra.mxu0 0.0
      %293 = vmatpush.msra.mxu0 0.0
      %294 = vmatpush.msra.mxu0 0.0
      %295 = vmatpush.msra.mxu0 0.0
      %296 = vmatpush.msra.mxu0 0.0
      %297 = vmatpush.msra.mxu0 %v242
      %298 = vmatmul.f32.gmra.mxu0 %v278
      %v299 = vpop.f32.mrf.mxu0
      %v300 = vadd.f32 %v273, %v299
      %301 = vmatmul.f32.gmra.mxu0 %v280
      %v302 = vpop.f32.mrf.mxu0
      %v303 = vadd.f32 %v276, %v302
      %304 = vdwg.mxu0
      %v305 = vlaneseq
      %v306 = vshrl.u32 %v305, 7
      %v307 = vadd.s32 %v306, 8
      %s308 = smul.u32 %s19, 8
      %s309 = ssub.s32 %s308, 1
      %v310 = vstv %s309
      %v311 = vadd.s32 %v310, %v306
      %v312 = vadd.s32 %v310, %v307
      %vm313 = vcmp.ge.s32.totalorder %v311, 0
      %vm314 = vcmp.ge.s32.totalorder %v312, 0
      %vm315 = vcmp.lt.s32.totalorder %v311, 11
      %vm316 = vcmp.lt.s32.totalorder %v312, 11
      %vm317 = vmand %vm313, %vm315
      %vm318 = vmand %vm314, %vm316
      %v319 = vsel %vm317, 1, 0
      %v320 = vsel %vm318, 1, 0
      %vm321 = vcmp.eq.s32.totalorder %v319, 1
      %vm322 = vcmp.eq.s32.totalorder %v320, 1
      %v323 = vsel %vm321, %v300, 0.0
      %v324 = vsel %vm322, %v303, 0.0
      %v326 = vrot.slane %v323, 7
      %327 = vrot.lane.b32.xlu0 %v326, 120
      %v328 = vpop.permute.xlu0 %327
      %v330 = vadd.f32 %v323, %v328
      %v331 = vadd.f32 %v324, %v328
      %vm332 = vcmask 64513
      %333 = vst.msk [vmem:[%s239 - $0x1] sm:$0xfe] %vm332, %v330
      %vm334 = vcmask 57344
      %335 = vst.msk [vmem:[%s239 + $0x7] sm:$0x1] %vm334, %v331
      %p336 = scmp.lt.s32.totalorder %s18, 1
      %s337 = scalar_select %p336, %s18, 1
      %p338 = scmp.lt.s32.totalorder %s19, 1
      %s339 = scalar_select %p338, %s19, 1
      %s340 = smul.addr %s337, 2
      %s341 = sadd.s32 %s339, %s340
      %s342 = smul.addr %s341, 8
      %s343 = scalar_lea.vmem %s3, %s342
      // Predicated region
      $region33: #{tpu_custom_call.1} parent=31 // pred_check
        %p344 = pneg %p125
      $region34: #{tpu_custom_call.1} parent=31 // pred_check_branch
        %346 = sbr.rel (%p344) target = $region36
      $region35: #{tpu_custom_call.1} parent=31 // pred_region
        _
      $region36: #{tpu_custom_call.1} parent=31 // pred_fallthru
        _
    $region32: #{tpu_custom_call.1} parent=5 // pred_fallthru
      _
    %p347 = scmp.le.s32.totalorder 2, %s9
    // Predicated region
    $region37: #{tpu_custom_call.1} parent=5 // pred_check
      %p348 = pneg %p347
    $region38: #{tpu_custom_call.1} parent=5 // pred_check_branch
      %350 = sbr.rel (%p348) target = $region40
    $region39: #{tpu_custom_call.1} parent=5 // pred_region
      %s351 = ssub.s32 %s9, 2
      // Predicated region
      $region41: #{tpu_custom_call.1} parent=39 // pred_check
        %p352 = pneg %p131
      $region42: #{tpu_custom_call.1} parent=39 // pred_check_branch
        %354 = sbr.rel (%p352) target = $region44
      $region43: #{tpu_custom_call.1} parent=39 // pred_region
        %p355 = scmp.lt.s32.totalorder %s20, 1
        %s356 = scalar_select %p355, %s20, 1
        %p357 = scmp.lt.s32.totalorder %s21, 1
        %s358 = scalar_select %p357, %s21, 1
        %s359 = smul.addr %s356, 2
        %s360 = sadd.s32 %s358, %s359
        %s361 = smul.addr %s360, 8
        %s362 = scalar_lea.vmem %s3, %s361
      $region44: #{tpu_custom_call.1} parent=39 // pred_fallthru
        _
    $region40: #{tpu_custom_call.1} parent=5 // pred_fallthru
      _
  $region6: #{tpu_custom_call.1} parent=0 // loop_footer
    %s13 = sadd.s32 1, %s9
  $region7: #{tpu_custom_call.1} parent=0 // loop_footer_branch
    %8 = sbr.rel target = $region3
  $region8: #{tpu_custom_call.1} parent=0 // loop_exit
    _

</llo_original>
